<compile_context>
chip_gen: v5e
topology: v5e:2x2
jax: 0.10.0
libtpu: 0.0.40
codegen_flags: <defaults>
</compile_context>

<pallas_src>
import math

import numpy as np
import jax
import jax.numpy as jnp
from jax.experimental import pallas as pl
from jax.experimental.pallas import tpu as pltpu


def _proj_kernel(x_ref, w_ref, b_ref, o_ref):
    """One grid step of the 1x1 conv as a (Cout, Cin) @ (Cin, TN) matmul.

    x_ref: (Cin, TN)   activation tile in its HBM dtype (f32); cast to the compute
                       dtype happens here in VMEM (no standalone XLA cast pass).
    w_ref: (Cout, Cin) weight matrix in the compute dtype, resident across the grid.
    b_ref: (Cout, 1)   bias column (f32).
    o_ref: (Cout, TN)  output tile -- last dim is the big lane-dense spatial tile,
                       so stores are full-width vst; dtype is the (bf16) intermediate.
    """
    x = x_ref[...].astype(w_ref.dtype)          # f32 -> bf16 in VMEM (VPU, free slot)
    acc = jnp.dot(w_ref[...], x, preferred_element_type=jnp.float32)
    o_ref[...] = (acc + b_ref[...]).astype(o_ref.dtype)


def _conv1x1_channels_first(x3, w_mat, b_col, *, tn, out_dtype):
    """x3: (B, Cin, HWp) with HWp % tn == 0; w_mat: (Cout, Cin); b_col: (Cout, 1).
    Returns (B, Cout, HWp) in out_dtype."""
    B, Cin, HWp = x3.shape
    Cout = w_mat.shape[0]
    n_blocks = HWp // tn

    flops = 2 * B * Cout * Cin * HWp
    bytes_accessed = (
        x3.size * x3.dtype.itemsize
        + w_mat.size * w_mat.dtype.itemsize
        + b_col.size * 4
        + B * Cout * HWp * np.dtype(out_dtype).itemsize
    )

    return pl.pallas_call(
        _proj_kernel,
        out_shape=jax.ShapeDtypeStruct((B, Cout, HWp), out_dtype),
        grid_spec=pltpu.PrefetchScalarGridSpec(
            num_scalar_prefetch=0,
            grid=(B, n_blocks),
            in_specs=[
                pl.BlockSpec((None, Cin, tn), lambda b, n: (b, 0, n)),
                pl.BlockSpec((Cout, Cin), lambda b, n: (0, 0)),
                pl.BlockSpec((Cout, 1), lambda b, n: (0, 0)),
            ],
            out_specs=pl.BlockSpec((None, Cout, tn), lambda b, n: (b, 0, n)),
        ),
        compiler_params=pltpu.CompilerParams(
            dimension_semantics=("parallel", "parallel"),
            vmem_limit_bytes=40 * 1024 * 1024,
        ),
        cost_estimate=pl.CostEstimate(
            flops=flops, transcendentals=0, bytes_accessed=bytes_accessed),
    )(x3, w_mat, b_col)


def patch_unembed_v2(x, weight, bias, *, patch_size=4, out_chans=3,
                     original_size=None, compute_dtype=jnp.bfloat16,
                     tile_target=16384):
    """x: (B, embed_dim, H, W) NCHW.  weight: (Cout, Cin, 1, 1), bias: (Cout,).
    Returns (B, out_chans, H*patch, W*patch) after the module's trim/crop."""
    B, Cin, H, W = x.shape
    r = patch_size
    Cout = out_chans * r * r
    assert weight.shape == (Cout, Cin, 1, 1)
    assert bias.shape == (Cout,)
    out_dtype = x.dtype

    HW = H * W
    x3 = x.reshape(B, Cin, HW)            # free reshape: stays channels-first
    w_mat = weight[:, :, 0, 0]            # (Cout, Cin)
    b_col = bias.reshape(Cout, 1).astype(jnp.float32)

    if compute_dtype is not None:
        w_mat = w_mat.astype(compute_dtype)   # tiny; x is NOT pre-cast (see kernel)
        inter_dtype = compute_dtype           # bf16 intermediate for the shuffle pass
    else:
        inter_dtype = out_dtype

    # --- spatial tiling -----------------------------------------------------
    # Lane-align HW, split into ~tile_target chunks, keep >=2 total grid steps
    # (v7x has 2 TensorCores sharded over the "parallel" grid axes), and prefer a
    # tile size that divides HW exactly so no pad copy is needed.
    m = pl.cdiv(HW, 128)                  # number of 128-lane groups
    hw128 = m * 128
    min_blocks = 1 if B >= 2 else min(2, m)
    desired = min(m, max(pl.cdiv(hw128, tile_target), min_blocks))
    if hw128 == HW:
        nb = desired
        while m % nb != 0:                # smallest block count >= desired dividing m
            nb += 1
        n_blocks, tn, hw_pad = nb, HW // nb, HW
    else:
        n_blocks = desired
        tn = pl.cdiv(m, n_blocks) * 128
        hw_pad = n_blocks * tn

    if hw_pad != HW:
        # TODO(synk): ragged HW costs one pad copy of x here; avoiding it needs a
        # clamped / Element-offset index_map plus overlap-tolerant output writes.
        x3 = jnp.pad(x3, ((0, 0), (0, 0), (0, hw_pad - HW)))

    y3 = _conv1x1_channels_first(x3, w_mat, b_col, tn=tn, out_dtype=inter_dtype)
    if hw_pad != HW:
        y3 = y3[:, :, :HW]

    # PixelShuffle(r) on the NCHW projection output:
    #   y3[b, c*r^2 + i*r + j, h, w] -> out[b, c, h*r + i, w*r + j]
    # TODO(synk): fully fusing this into the kernel store needs an in-VMEM lane
    # interleave ((j,w) -> w*r+j) that is not a rectangular out_spec block and whose
    # Mosaic relayout lowering is not guaranteed, so it stays a single XLA transpose
    # pass on the bf16 intermediate (traffic already halved vs. an f32 intermediate).
    y = y3.reshape(B, out_chans, r, r, H, W)
    y = jnp.transpose(y, (0, 1, 4, 2, 5, 3))
    y = y.reshape(B, out_chans, H * r, W * r).astype(out_dtype)

    if original_size is not None:
        th, tw = original_size
        return y[:, :, :th, :tw]
    if (H * r) % 2 != 0:
        y = y[:, :, :-1, :]
    if (W * r) % 2 != 0:
        y = y[:, :, :, :-1]
    return y


def _reference(x, weight, bias, *, patch_size=4, out_chans=3, inter_dtype=None):
    """Plain-JAX reference of the same semantics (optionally with a rounded
    intermediate to match the kernel's bf16 store)."""
    B, Cin, H, W = x.shape
    y = jnp.einsum('bchw,oc->bohw', x, weight[:, :, 0, 0]) \
        + bias[None, :, None, None]
    if inter_dtype is not None:
        y = y.astype(inter_dtype)
    r = patch_size
    y = y.reshape(B, out_chans, r, r, H, W)
    y = jnp.transpose(y, (0, 1, 4, 2, 5, 3))
    return y.reshape(B, out_chans, H * r, W * r).astype(x.dtype)


if __name__ == "__main__":
    key = jax.random.PRNGKey(0)
    k_x, k_w, k_b = jax.random.split(key, 3)

    B, embed_dim, H, W = 2, 96, 16, 16
    patch_size, out_chans = 4, 3
    Cout = out_chans * patch_size ** 2  # 48

    x = jax.random.normal(k_x, (B, embed_dim, H, W), dtype=jnp.float32)
    # deterministic synthetic params for Conv2d(embed_dim, Cout, kernel_size=1)
    bound = 1.0 / math.sqrt(embed_dim)
    weight = jax.random.uniform(k_w, (Cout, embed_dim, 1, 1),
                                minval=-bound, maxval=bound, dtype=jnp.float32)
    bias = jax.random.uniform(k_b, (Cout,), minval=-bound, maxval=bound,
                              dtype=jnp.float32)

    out = patch_unembed_v2(x, weight, bias,
                           patch_size=patch_size, out_chans=out_chans)
    out = jax.block_until_ready(out)
    assert out.shape == (B, out_chans, H * patch_size, W * patch_size)
    assert out.dtype == x.dtype

    # Tight check: reference on the same bf16-rounded inputs, f32 accumulation, and
    # the same bf16 intermediate rounding (matches the kernel path up to summation
    # order inside the MXU).
    xb = x.astype(jnp.bfloat16).astype(jnp.float32)
    wb = weight.astype(jnp.bfloat16).astype(jnp.float32)
    ref_matched = _reference(xb, wb, bias, patch_size=patch_size,
                             out_chans=out_chans, inter_dtype=jnp.bfloat16)
    assert jnp.allclose(out, ref_matched, atol=1e-2, rtol=1e-2)

    # Sanity check against the full-precision f32 reference within bf16 tolerance.
    ref_f32 = _reference(x, weight, bias, patch_size=patch_size,
                         out_chans=out_chans)
    assert jnp.allclose(out, ref_f32, atol=1e-1, rtol=1e-1)

    print("KERNEL_OK")
</pallas_src>

<mosaic_0001>
module attributes {stable_mosaic.version = 11 : i64} {
  func.func @_proj_kernel(%arg0: i32, %arg1: i32, %arg2: memref<1x96x256xf32, #tpu.memory_space<vmem>>, %arg3: memref<48x96xbf16, #tpu.memory_space<vmem>>, %arg4: memref<48x1xf32, #tpu.memory_space<vmem>>, %arg5: memref<1x48x256xbf16, #tpu.memory_space<vmem>>) attributes {dimension_semantics = [#tpu.dimension_semantics<parallel>, #tpu.dimension_semantics<parallel>], iteration_bounds = array<i64: 2, 1>, scalar_prefetch = 0 : i64, scratch_operands = 0 : i64, tpu.core_type = #tpu.core_type<tc>, window_params = [{transform_indices = @transform_0, window_bounds = array<i64: 1, 96, 256>}, {pipeline_mode = #tpu.pipeline_mode<synchronous>, transform_indices = @transform_1, window_bounds = array<i64: 48, 96>}, {pipeline_mode = #tpu.pipeline_mode<synchronous>, transform_indices = @transform_2, window_bounds = array<i64: 48, 1>}, {transform_indices = @transform_3, window_bounds = array<i64: 1, 48, 256>}]} {
    %c0 = arith.constant 0 : index
    %c0_0 = arith.constant 0 : index
    %c0_1 = arith.constant 0 : index
    %0 = vector.load %arg2[%c0, %c0_0, %c0_1] : memref<1x96x256xf32, #tpu.memory_space<vmem>>, vector<1x96x256xf32>
    %1 = vector.shape_cast %0 : vector<1x96x256xf32> to vector<96x256xf32>
    %2 = arith.truncf %1 : vector<96x256xf32> to vector<96x256xbf16>
    %c0_2 = arith.constant 0 : index
    %c0_3 = arith.constant 0 : index
    %3 = vector.load %arg3[%c0_2, %c0_3] : memref<48x96xbf16, #tpu.memory_space<vmem>>, vector<48x96xbf16>
    %cst = arith.constant dense<0.000000e+00> : vector<48x256xf32>
    %4 = tpu.matmul %3, %2, %cst {dimension_numbers = #tpu.dot_dimension_numbers<[1], [0], [0], [1], [0, 0, 1, 1], [], []>} : vector<48x96xbf16>, vector<96x256xbf16>, vector<48x256xf32> -> vector<48x256xf32>
    %c0_4 = arith.constant 0 : index
    %c0_5 = arith.constant 0 : index
    %5 = vector.load %arg4[%c0_4, %c0_5] : memref<48x1xf32, #tpu.memory_space<vmem>>, vector<48x1xf32>
    %6 = vector.broadcast %5 : vector<48x1xf32> to vector<48x256xf32>
    %7 = arith.addf %4, %6 : vector<48x256xf32>
    %8 = arith.truncf %7 : vector<48x256xf32> to vector<48x256xbf16>
    %c0_6 = arith.constant 0 : index
    %c0_7 = arith.constant 0 : index
    %c0_8 = arith.constant 0 : index
    %9 = vector.load %arg5[%c0_6, %c0_7, %c0_8] : memref<1x48x256xbf16, #tpu.memory_space<vmem>>, vector<1x48x256xbf16>
    %10 = vector.shape_cast %9 : vector<1x48x256xbf16> to vector<48x256xbf16>
    %11 = vector.shape_cast %8 : vector<48x256xbf16> to vector<1x48x256xbf16>
    tpu.vector_store %arg5[%c0_6, %c0_7, %c0_8], %11 {strides = array<i32>} : memref<1x48x256xbf16, #tpu.memory_space<vmem>>, vector<1x48x256xbf16>,
    return
  }
  func.func @transform_0(%arg0: i32, %arg1: i32) -> (i32, i32, i32) {
    %c0_i32 = arith.constant 0 : i32
    %c0_i32_0 = arith.constant 0 : i32
    return %arg0, %c0_i32, %arg1 : i32, i32, i32
  }
  func.func @transform_1(%arg0: i32, %arg1: i32) -> (i32, i32) {
    %c0_i32 = arith.constant 0 : i32
    %c0_i32_0 = arith.constant 0 : i32
    %c0_i32_1 = arith.constant 0 : i32
    return %c0_i32, %c0_i32_0 : i32, i32
  }
  func.func @transform_2(%arg0: i32, %arg1: i32) -> (i32, i32) {
    %c0_i32 = arith.constant 0 : i32
    %c0_i32_0 = arith.constant 0 : i32
    %c0_i32_1 = arith.constant 0 : i32
    return %c0_i32, %c0_i32_0 : i32, i32
  }
  func.func @transform_3(%arg0: i32, %arg1: i32) -> (i32, i32, i32) {
    %c0_i32 = arith.constant 0 : i32
    %c0_i32_0 = arith.constant 0 : i32
    return %arg0, %c0_i32, %arg1 : i32, i32, i32
  }
}

</mosaic_0001>

<llo_original>
// kernel: tpu_custom_call.1
$region0: #{tpu_custom_call.1}
  #allocation0 [shape = 'u32[]', space=smem, size = 0x4, offset = 0x4, fixed_abs, tag = 'smem constant byte address 0x4 - core index']
  #allocation1 [shape = 'u32[72,128]{1,0:T(1,128)}', space=vmem, size = 0x9000, scoped, tag = 'internal scratch']
  %s0 = inlined_call_operand.hbm [shape: f32[2,96,256], index: 0, kind: input, shape index: {}]
  %s1 = inlined_call_operand.vmem [shape: bf16[48,96], index: 1, kind: input, shape index: {}]
  %s2 = inlined_call_operand.vmem [shape: f32[48,1], index: 2, kind: input, shape index: {}]
  %s3 = inlined_call_operand.hbm [shape: bf16[2,48,256], index: 3, kind: output, shape index: {}]
  %s4 = sld [smem:[#allocation0]]
  $region49: #{tpu_custom_call.1} parent=0
    _
  %s6 = ssub.s32 1, %s4
  %s7 = scalar_select 0, %s6, %s4
  $region1: #{tpu_custom_call.1} parent=0
    #allocation2 [shape = 'u8[196608]{0}', space=vmem, size = 0x30000, scoped, tag = 'input window, operand 0']
    #allocation3 [shape = 's32[2]{0}', space=sflag, size = 0x8, scoped, tag = 'scoped memory for tpu_custom_call.1']
    #allocation4 [shape = 's32[2]{0}', space=sflag, size = 0x8, scoped, tag = 'scoped memory for tpu_custom_call.1']
    #allocation5 [shape = 'u8[49152]{0}', space=vmem, size = 0xc000, scoped, tag = 'output window, operand 0']
    %8 = vsyncpa [#allocation3], 0
    %s9 = scalar_lea.sflag [#allocation3], 1
    %10 = vsyncpa %s9, 0
    %11 = vsyncpa [#allocation4], 0
    %s12 = scalar_lea.sflag [#allocation4], 1
    %13 = vsyncpa %s12, 0
    loop: start=0, step=1, limit=4
    $region2: #{tpu_custom_call.1} parent=1 // loop_pre_header
      _
    $region3: #{tpu_custom_call.1} parent=1 // loop_header
      %s15 = sphi 0, %s19
      %p16 = scmp.ge.s32.totalorder %s15, 4
      %s22 = sphi 0, %s34
      %s23 = sphi 0, %s30
      %s24 = sphi 0, %s22
      %s25 = sphi 0, %s23
      %s26 = sphi 0, %s24
      %s27 = sphi 0, %s25
      %s39 = sphi 0, %s41
      %s42 = sphi 0, %s39
      %s43 = sphi 0, %s42
      %s59 = sphi 0, %s43
      %s63 = sphi 0, %s63
      %s65 = sphi 0, %s63
      %s66 = sphi 0, %s65
      %s80 = sphi 0, %s66
      %s84 = sphi 0, %s84
      %s86 = sphi 0, %s84
      %s87 = sphi 0, %s86
      %s101 = sphi 0, %s87
      %s109 = sphi 0, %s111
      %s112 = sphi 0, %s109
      %s113 = sphi 0, %s112
      %s129 = sphi 0, %s113
    $region4: #{tpu_custom_call.1} parent=1 // loop_header_branch
      %18 = sbr.rel (%p16) target = $region8
    $region5: #{tpu_custom_call.1} parent=1 // loop_body
      %s20 = ssub.s32 %s15, 1
      %s21 = ssub.s32 %s15, 2
      %s28 = sadd.s32 1, %s23
      %p29 = scmp.ge.s32.totalorder %s28, 1
      %s30 = scalar_select %p29, 0, %s28
      %s31 = sadd.s32 1, %s22
      %s32 = scalar_select %p29, %s31, %s22
      %p33 = scmp.ge.s32.totalorder %s32, 2
      %s34 = scalar_select %p33, 0, %s32
      %s35 = ssub.s32 %s22, %s34
      %s36 = ssub.s32 %s23, %s30
      %s37 = sor.u32 %s35, %s36
      %p38 = scmp.eq.s32.totalorder %s37, 0
      %s40 = sadd.s32 %s39, 1
      %s41 = scalar_select %p38, %s39, %s40
      %p44 = pneg %p38
      %p45 = scmp.eq.s32.totalorder %s15, 1
      %p46 = por %p44, %p45
      %p47 = scmp.ne.s32.totalorder %s39, %s42
      %p48 = scmp.eq.s32.totalorder %s15, 0
      %p49 = por %p47, %p48
      %p50 = scmp.ne.s32.totalorder %s39, %s42
      %p51 = scmp.eq.s32.totalorder %s20, 1
      %p52 = por %p50, %p51
      %p53 = scmp.ne.s32.totalorder %s42, %s43
      %p54 = scmp.eq.s32.totalorder %s20, 0
      %p55 = por %p53, %p54
      %p56 = scmp.ne.s32.totalorder %s42, %s43
      %p57 = scmp.eq.s32.totalorder %s21, 1
      %p58 = por %p56, %p57
      %p60 = scmp.ne.s32.totalorder %s43, %s59
      %p61 = scmp.eq.s32.totalorder %s21, 0
      %p62 = por %p60, %p61
      %s64 = sadd.s32 %s63, 1
      %p67 = scmp.eq.s32.totalorder %s15, 1
      %p68 = scmp.ne.s32.totalorder %s63, %s65
      %p69 = scmp.eq.s32.totalorder %s15, 0
      %p70 = por %p68, %p69
      %p71 = scmp.ne.s32.totalorder %s63, %s65
      %p72 = scmp.eq.s32.totalorder %s20, 1
      %p73 = por %p71, %p72
      %p74 = scmp.ne.s32.totalorder %s65, %s66
      %p75 = scmp.eq.s32.totalorder %s20, 0
      %p76 = por %p74, %p75
      %p77 = scmp.ne.s32.totalorder %s65, %s66
      %p78 = scmp.eq.s32.totalorder %s21, 1
      %p79 = por %p77, %p78
      %p81 = scmp.ne.s32.totalorder %s66, %s80
      %p82 = scmp.eq.s32.totalorder %s21, 0
      %p83 = por %p81, %p82
      %s85 = sadd.s32 %s84, 1
      %p88 = scmp.eq.s32.totalorder %s15, 1
      %p89 = scmp.ne.s32.totalorder %s84, %s86
      %p90 = scmp.eq.s32.totalorder %s15, 0
      %p91 = por %p89, %p90
      %p92 = scmp.ne.s32.totalorder %s84, %s86
      %p93 = scmp.eq.s32.totalorder %s20, 1
      %p94 = por %p92, %p93
      %p95 = scmp.ne.s32.totalorder %s86, %s87
      %p96 = scmp.eq.s32.totalorder %s20, 0
      %p97 = por %p95, %p96
      %p98 = scmp.ne.s32.totalorder %s86, %s87
      %p99 = scmp.eq.s32.totalorder %s21, 1
      %p100 = por %p98, %p99
      %p102 = scmp.ne.s32.totalorder %s87, %s101
      %p103 = scmp.eq.s32.totalorder %s21, 0
      %p104 = por %p102, %p103
      %s105 = ssub.s32 %s22, %s34
      %s106 = ssub.s32 %s23, %s30
      %s107 = sor.u32 %s105, %s106
      %p108 = scmp.eq.s32.totalorder %s107, 0
      %s110 = sadd.s32 %s109, 1
      %s111 = scalar_select %p108, %s109, %s110
      %p114 = pneg %p108
      %p115 = scmp.eq.s32.totalorder %s15, 1
      %p116 = por %p114, %p115
      %p117 = scmp.ne.s32.totalorder %s109, %s112
      %p118 = scmp.eq.s32.totalorder %s15, 0
      %p119 = por %p117, %p118
      %p120 = scmp.ne.s32.totalorder %s109, %s112
      %p121 = scmp.eq.s32.totalorder %s20, 1
      %p122 = por %p120, %p121
      %p123 = scmp.ne.s32.totalorder %s112, %s113
      %p124 = scmp.eq.s32.totalorder %s20, 0
      %p125 = por %p123, %p124
      %p126 = scmp.ne.s32.totalorder %s112, %s113
      %p127 = scmp.eq.s32.totalorder %s21, 1
      %p128 = por %p126, %p127
      %p130 = scmp.ne.s32.totalorder %s113, %s129
      %p131 = scmp.eq.s32.totalorder %s21, 0
      %p132 = por %p130, %p131
      %p133 = scmp.le.s32.totalorder 1, %s15
      %p134 = scmp.lt.s32.totalorder %s15, 3
      %p135 = pnand %p133, %p134
      %p136 = pneg %p135
      // Predicated region
      $region9: #{tpu_custom_call.1} parent=5 // pred_check
        _
      $region10: #{tpu_custom_call.1} parent=5 // pred_check_branch
        %138 = sbr.rel (%p135) target = $region12
      $region11: #{tpu_custom_call.1} parent=5 // pred_region
        %s139 = ssub.s32 %s15, 1
        // Predicated region
        $region13: #{tpu_custom_call.1} parent=11 // pred_check
          %p140 = pneg %p76
        $region14: #{tpu_custom_call.1} parent=11 // pred_check_branch
          %142 = sbr.rel (%p140) target = $region16
        $region15: #{tpu_custom_call.1} parent=11 // pred_region
          _
        $region16: #{tpu_custom_call.1} parent=11 // pred_fallthru
          _
        // Predicated region
        $region17: #{tpu_custom_call.1} parent=11 // pred_check
          %p143 = pneg %p97
        $region18: #{tpu_custom_call.1} parent=11 // pred_check_branch
          %145 = sbr.rel (%p143) target = $region20
        $region19: #{tpu_custom_call.1} parent=11 // pred_region
          _
        $region20: #{tpu_custom_call.1} parent=11 // pred_fallthru
          _
      $region12: #{tpu_custom_call.1} parent=5 // pred_fallthru
        _
      %p146 = scmp.lt.s32.totalorder %s15, 2
      // Predicated region
      $region21: #{tpu_custom_call.1} parent=5 // pred_check
        %p147 = pneg %p146
      $region22: #{tpu_custom_call.1} parent=5 // pred_check_branch
        %149 = sbr.rel (%p147) target = $region24
      $region23: #{tpu_custom_call.1} parent=5 // pred_region
        // Predicated region
        $region25: #{tpu_custom_call.1} parent=23 // pred_check
          %p150 = pneg %p49
        $region26: #{tpu_custom_call.1} parent=23 // pred_check_branch
          %152 = sbr.rel (%p150) target = $region28
        $region27: #{tpu_custom_call.1} parent=23 // pred_region
          %s153 = sand.u32 %s39, 1
          %s154 = scalar_lea.sflag [#allocation3], %s153
          %s155 = sand.u32 %s39, 1
          %s156 = smul.addr %s155, 192
          %s157 = scalar_lea.vmem [#allocation2], %s156
          %s158 = smul.u32 2, %s23
          %160 = vsyncadd %s154, 0
          %s161 = smul.addr %s22, 24
          %s162 = sadd.s32 %s158, %s161
          %s163 = smul.addr %s162, 8
          %s164 = scalar_lea.hbm %s0, %s163
          %s165 = sshll.u32 %s164, 4
          %s166 = int_to_ptr.hbm [resolvable:$true] %s165
          %s167 = sshll.u32 %s157, 4
          %s168 = int_to_ptr.vmem [resolvable:$true] %s167
          %173 = dma.hbm_to_vmem [thread:$0]  %s166, 3072, %s168, %s154, 256, 256, 16
        $region28: #{tpu_custom_call.1} parent=23 // pred_fallthru
          _
      $region24: #{tpu_custom_call.1} parent=5 // pred_fallthru
        _
      %p174 = scmp.le.s32.totalorder 1, %s15
      %p175 = scmp.lt.s32.totalorder %s15, 3
      %p176 = pnand %p174, %p175
      %p177 = pneg %p176
      // Predicated region
      $region29: #{tpu_custom_call.1} parent=5 // pred_check
        _
      $region30: #{tpu_custom_call.1} parent=5 // pred_check_branch
        %179 = sbr.rel (%p176) target = $region32
      $region31: #{tpu_custom_call.1} parent=5 // pred_region
        %s180 = ssub.s32 %s15, 1
        %s181 = sand.u32 %s42, 1
        %s182 = scalar_lea.sflag [#allocation3], %s181
        %s183 = sand.u32 %s42, 1
        %s184 = smul.addr %s183, 192
        %s185 = scalar_lea.vmem [#allocation2], %s184
        // Predicated region
        $region33: #{tpu_custom_call.1} parent=31 // pred_check
          %p186 = pneg %p55
        $region34: #{tpu_custom_call.1} parent=31 // pred_check_branch
          %188 = sbr.rel (%p186) target = $region36
        $region35: #{tpu_custom_call.1} parent=31 // pred_region
          %190 = dma.done %s182, 3072
        $region36: #{tpu_custom_call.1} parent=31 // pred_fallthru
          _
        %s191 = sand.u32 %s42, 1
        %s192 = scalar_lea.sflag [#allocation3], %s191
        %s193 = sand.u32 %s42, 1
        %s194 = smul.addr %s193, 192
        %s195 = scalar_lea.vmem [#allocation2], %s194
        %p196 = pneg %p55
        %p197 = pneg %p52
        %p198 = pneg %p76
        %p199 = pneg %p73
        %p200 = pneg %p97
        %p201 = pneg %p94
        %p202 = pneg %p125
        %p203 = pneg %p122
        %s204 = sand.u32 %s112, 1
        %s205 = scalar_lea.sflag [#allocation4], %s204
        %s206 = sand.u32 %s112, 1
        %s207 = smul.addr %s206, 48
        %s208 = scalar_lea.vmem [#allocation5], %s207
        %s209 = smul.u32 2, %s25
        %s210 = smul.u32 2, %s25
        %v212 = vld [vmem:[%s185] sm:$0xff]
        %v213 = vld [vmem:[%s185 + $0x8] sm:$0xff]
        %v214 = vld [vmem:[%s185 + $0x10] sm:$0xff]
        %v215 = vld [vmem:[%s185 + $0x18] sm:$0xff]
        %v216 = vld [vmem:[%s185 + $0x20] sm:$0xff]
        %v217 = vld [vmem:[%s185 + $0x28] sm:$0xff]
        %v218 = vld [vmem:[%s185 + $0x30] sm:$0xff]
        %v219 = vld [vmem:[%s185 + $0x38] sm:$0xff]
        %v220 = vld [vmem:[%s185 + $0x40] sm:$0xff]
        %v221 = vld [vmem:[%s185 + $0x48] sm:$0xff]
        %v222 = vld [vmem:[%s185 + $0x50] sm:$0xff]
        %v223 = vld [vmem:[%s185 + $0x58] sm:$0xff]
        %v224 = vld [vmem:[%s185 + $0x60] sm:$0xff]
        %v225 = vld [vmem:[%s185 + $0x68] sm:$0xff]
        %v226 = vld [vmem:[%s185 + $0x70] sm:$0xff]
        %v227 = vld [vmem:[%s185 + $0x78] sm:$0xff]
        %v228 = vld [vmem:[%s185 + $0x80] sm:$0xff]
        %v229 = vld [vmem:[%s185 + $0x88] sm:$0xff]
        %v230 = vld [vmem:[%s185 + $0x90] sm:$0xff]
        %v231 = vld [vmem:[%s185 + $0x98] sm:$0xff]
        %v232 = vld [vmem:[%s185 + $0xa0] sm:$0xff]
        %v233 = vld [vmem:[%s185 + $0xa8] sm:$0xff]
        %v234 = vld [vmem:[%s185 + $0xb0] sm:$0xff]
        %v235 = vld [vmem:[%s185 + $0xb8] sm:$0xff]
        %v236 = vpack.c.bf16 %v214, %v212
        %v237 = vpack.c.bf16 %v215, %v213
        %v238 = vpack.c.bf16 %v218, %v216
        %v239 = vpack.c.bf16 %v219, %v217
        %v240 = vpack.c.bf16 %v222, %v220
        %v241 = vpack.c.bf16 %v223, %v221
        %v242 = vpack.c.bf16 %v226, %v224
        %v243 = vpack.c.bf16 %v227, %v225
        %v244 = vpack.c.bf16 %v230, %v228
        %v245 = vpack.c.bf16 %v231, %v229
        %v246 = vpack.c.bf16 %v234, %v232
        %v247 = vpack.c.bf16 %v235, %v233
        %v248 = vld [vmem:[%s1] sm:$0xf]
        %v249 = vld [vmem:[%s1 + $0x4] sm:$0xf]
        %v250 = vld [vmem:[%s1 + $0x8] sm:$0xf]
        %v251 = vld [vmem:[%s1 + $0xc] sm:$0xf]
        %v252 = vld [vmem:[%s1 + $0x10] sm:$0xf]
        %v253 = vld [vmem:[%s1 + $0x14] sm:$0xf]
        %v254 = vld [vmem:[%s2] sm:$0xff]
        %v255 = vld [vmem:[%s2 + $0x8] sm:$0xff]
        %v256 = vld [vmem:[%s2 + $0x10] sm:$0xff]
        %v257 = vld [vmem:[%s2 + $0x18] sm:$0xff]
        %v258 = vld [vmem:[%s2 + $0x20] sm:$0xff]
        %v259 = vld [vmem:[%s2 + $0x28] sm:$0xff]
        %261 = vset.pattern.permute.xlu0 0
        %262 = vperm.xlu0 %261, %v254
        %v263 = vpop.permute.xlu0 %262
        %266 = vset.pattern.permute.xlu0 0
        %267 = vperm.xlu0 %266, %v255
        %v268 = vpop.permute.xlu0 %267
        %271 = vset.pattern.permute.xlu0 0
        %272 = vperm.xlu0 %271, %v256
        %v273 = vpop.permute.xlu0 %272
        %276 = vset.pattern.permute.xlu0 0
        %277 = vperm.xlu0 %276, %v257
        %v278 = vpop.permute.xlu0 %277
        %281 = vset.pattern.permute.xlu0 0
        %282 = vperm.xlu0 %281, %v258
        %v283 = vpop.permute.xlu0 %282
        %286 = vset.pattern.permute.xlu0 0
        %287 = vperm.xlu0 %286, %v259
        %v288 = vpop.permute.xlu0 %287
        %v296 = vunpack.c.l.b16 %v248
        %v297 = vunpack.c.l.b16 %v249
        %v298 = vunpack.c.l.b16 %v250
        %v299 = vunpack.c.l.b16 %v251
        %v300 = vunpack.c.l.b16 %v252
        %v301 = vunpack.c.l.b16 %v253
        %v302 = vpack.c.b16 %v297, %v296
        %v303 = vpack.c.b16 %v299, %v298
        %v304 = vpack.c.b16 %v301, %v300
        %vm305 = vcmask 785408
        %v307 = vsel %vm305, %v302, 0
        %v310 = vsel %vm305, %v303, 0
        %v313 = vsel %vm305, %v304, 0
        %315 = vmatpush.bf16.msra.mxu0 0
        %316 = vmatpush.bf16.msra.mxu0 0
        %317 = vmatpush.bf16.msra.mxu0 %v246
        %318 = vmatpush.bf16.msra.mxu0 %v244
        %319 = vmatpush.bf16.msra.mxu0 %v242
        %320 = vmatpush.bf16.msra.mxu0 %v240
        %321 = vmatpush.bf16.msra.mxu0 %v238
        %322 = vmatpush.bf16.msra.mxu0 %v236
        %323 = vmatmul.bf16.gmra.mxu0 %v307
        %v324 = vpop.f32.mrf.mxu0
        %v325 = vadd.f32 %v263, %v324
        %v326 = vpop.f32.mrf.mxu0
        %v327 = vadd.f32 %v268, %v326
        %328 = vmatmul.bf16.gmra.mxu0 %v310
        %v329 = vpop.f32.mrf.mxu0
        %v330 = vadd.f32 %v273, %v329
        %v331 = vpop.f32.mrf.mxu0
        %v332 = vadd.f32 %v278, %v331
        %333 = vmatmul.bf16.gmra.mxu0 %v313
        %v334 = vpop.f32.mrf.mxu0
        %v335 = vadd.f32 %v283, %v334
        %v336 = vpop.f32.mrf.mxu0
        %v337 = vadd.f32 %v288, %v336
        %338 = vdwg.mxu0
        %339 = vmatpush.bf16.msra.mxu0 0
        %340 = vmatpush.bf16.msra.mxu0 0
        %341 = vmatpush.bf16.msra.mxu0 %v247
        %342 = vmatpush.bf16.msra.mxu0 %v245
        %343 = vmatpush.bf16.msra.mxu0 %v243
        %344 = vmatpush.bf16.msra.mxu0 %v241
        %345 = vmatpush.bf16.msra.mxu0 %v239
        %346 = vmatpush.bf16.msra.mxu0 %v237
        %347 = vmatmul.bf16.gmra.mxu0 %v307
        %v348 = vpop.f32.mrf.mxu0
        %v349 = vadd.f32 %v263, %v348
        %v350 = vpop.f32.mrf.mxu0
        %v351 = vadd.f32 %v268, %v350
        %352 = vmatmul.bf16.gmra.mxu0 %v310
        %v353 = vpop.f32.mrf.mxu0
        %v354 = vadd.f32 %v273, %v353
        %v355 = vpop.f32.mrf.mxu0
        %v356 = vadd.f32 %v278, %v355
        %357 = vmatmul.bf16.gmra.mxu0 %v313
        %v358 = vpop.f32.mrf.mxu0
        %v359 = vadd.f32 %v283, %v358
        %v360 = vpop.f32.mrf.mxu0
        %v361 = vadd.f32 %v288, %v360
        %362 = vdwg.mxu0
        %v363 = vpack.c.bf16 %v349, %v325
        %v364 = vpack.c.bf16 %v351, %v327
        %v365 = vpack.c.bf16 %v354, %v330
        %v366 = vpack.c.bf16 %v356, %v332
        %v367 = vpack.c.bf16 %v359, %v335
        %v368 = vpack.c.bf16 %v361, %v337
        %369 = vst [vmem:[%s208] sm:$0xff] %v363
        %370 = vst [vmem:[%s208 + $0x8] sm:$0xff] %v364
        %371 = vst [vmem:[%s208 + $0x10] sm:$0xff] %v365
        %372 = vst [vmem:[%s208 + $0x18] sm:$0xff] %v366
        %373 = vst [vmem:[%s208 + $0x20] sm:$0xff] %v367
        %374 = vst [vmem:[%s208 + $0x28] sm:$0xff] %v368
        %s375 = sand.u32 %s112, 1
        %s376 = scalar_lea.sflag [#allocation4], %s375
        %s377 = sand.u32 %s112, 1
        %s378 = smul.addr %s377, 48
        %s379 = scalar_lea.vmem [#allocation5], %s378
        // Predicated region
        $region37: #{tpu_custom_call.1} parent=31 // pred_check
          %p380 = pneg %p122
        $region38: #{tpu_custom_call.1} parent=31 // pred_check_branch
          %382 = sbr.rel (%p380) target = $region40
        $region39: #{tpu_custom_call.1} parent=31 // pred_region
          %s383 = smul.u32 2, %s25
          %385 = vsyncadd %s376, 0
          %s386 = smul.addr %s24, 12
          %s387 = sadd.s32 %s383, %s386
          %s388 = smul.addr %s387, 4
          %s389 = scalar_lea.hbm %s3, %s388
          %s390 = sshll.u32 %s379, 4
          %s391 = int_to_ptr.vmem [resolvable:$true] %s390
          %s392 = sshll.u32 %s389, 4
          %s393 = int_to_ptr.hbm [resolvable:$true] %s392
          %398 = dma.vmem_to_hbm [thread:$0]  %s391, 768, %s393, %s376, 128, 128, 8
        $region40: #{tpu_custom_call.1} parent=31 // pred_fallthru
          _
      $region32: #{tpu_custom_call.1} parent=5 // pred_fallthru
        _
      %p399 = scmp.le.s32.totalorder 2, %s15
      // Predicated region
      $region41: #{tpu_custom_call.1} parent=5 // pred_check
        %p400 = pneg %p399
      $region42: #{tpu_custom_call.1} parent=5 // pred_check_branch
        %402 = sbr.rel (%p400) target = $region44
      $region43: #{tpu_custom_call.1} parent=5 // pred_region
        %s403 = ssub.s32 %s15, 2
        // Predicated region
        $region45: #{tpu_custom_call.1} parent=43 // pred_check
          %p404 = pneg %p128
        $region46: #{tpu_custom_call.1} parent=43 // pred_check_branch
          %406 = sbr.rel (%p404) target = $region48
        $region47: #{tpu_custom_call.1} parent=43 // pred_region
          %s407 = sand.u32 %s113, 1
          %s408 = scalar_lea.sflag [#allocation4], %s407
          %s409 = sand.u32 %s113, 1
          %s410 = smul.addr %s409, 48
          %s411 = scalar_lea.vmem [#allocation5], %s410
          %413 = dma.done %s408, 768
        $region48: #{tpu_custom_call.1} parent=43 // pred_fallthru
          _
      $region44: #{tpu_custom_call.1} parent=5 // pred_fallthru
        _
    $region6: #{tpu_custom_call.1} parent=1 // loop_footer
      %s19 = sadd.s32 1, %s15
    $region7: #{tpu_custom_call.1} parent=1 // loop_footer_branch
      %14 = sbr.rel target = $region3
    $region8: #{tpu_custom_call.1} parent=1 // loop_exit
      _
    %414 = vsyncpa [#allocation3], 1
    %s415 = scalar_lea.sflag [#allocation3], 1
    %416 = vsyncpa %s415, 1
    %417 = vsyncpa [#allocation4], 1
    %s418 = scalar_lea.sflag [#allocation4], 1
    %419 = vsyncpa %s418, 1

</llo_original>
